<compile_context>
chip_gen: v7x
topology: tpu7x:2x2x1
jax: 0.10.0
libtpu: 0.0.40
codegen_flags: <defaults>
</compile_context>

<pallas_src>
import warnings

import numpy as np
import jax
import jax.numpy as jnp
from jax.experimental import pallas as pl
from jax.experimental.pallas import tpu as pltpu


def _identity_kernel(x_ref, o_ref):
    # Output buffer IS the input buffer (input_output_aliases={0: 0}); there is
    # nothing to compute and nothing to move, so the body is intentionally
    # empty (zero HBM traffic, zero VMEM footprint).
    del x_ref, o_ref


def _identity_pallas(x):
    """Zero-byte aliased pass-through of an already-squeezed array."""
    return pl.pallas_call(
        _identity_kernel,
        out_shape=jax.ShapeDtypeStruct(x.shape, x.dtype),
        # Raw HBM refs: no grid, no tile DMA, no VMEM staging.
        in_specs=[pl.BlockSpec(memory_space=pl.ANY)],
        out_specs=pl.BlockSpec(memory_space=pl.ANY),
        # Output aliases input -> zero bytes moved inside the kernel.
        input_output_aliases={0: 0},
        # Insurance: never let the no-op custom call be optimized away.
        compiler_params=pltpu.CompilerParams(has_side_effects=True),
    )(x)


def _identity_forward_impl(x):
    # torch.Tensor.squeeze(): drop ALL size-1 dims (metadata only / bitcast),
    # done BEFORE the kernel so the alias is between same-shaped buffers.
    return _identity_pallas(jnp.squeeze(x))


# Donation makes the input->output alias real end-to-end (no defensive copy
# outside the kernel).  Contract: callers must not read `x` after this call.
identity_forward = jax.jit(_identity_forward_impl, donate_argnums=0)


# TODO(synk): `transform` (None by default) is an arbitrary user callable and
# is not translated; only the default transform=None path is implemented.


if __name__ == "__main__":
    # Donation is a no-op (with a benign warning) on backends/runners that do
    # not support it (e.g. interpreted runs); keep the log clean.
    warnings.filterwarnings(
        "ignore", message="Some donated buffers were not usable")

    key = jax.random.PRNGKey(0)
    # NCHW with a size-1 channel dim so .squeeze() actually does something:
    # (2, 1, 16, 16) -> (2, 16, 16)
    x = jax.random.normal(key, (2, 1, 16, 16), dtype=jnp.float32)

    # Reference computed and pulled to host BEFORE the donating call, since
    # `x` is invalid afterwards.
    ref = jax.device_get(jnp.squeeze(x))

    out = jax.block_until_ready(identity_forward(x))

    assert out.shape == ref.shape, (out.shape, ref.shape)
    assert out.dtype == ref.dtype, (out.dtype, ref.dtype)
    assert np.array_equal(np.asarray(out), ref)

    print("KERNEL_OK")
</pallas_src>

<mosaic_0001>
module attributes {stable_mosaic.version = 11 : i64} {
  func.func @_identity_kernel(%arg0: memref<2x16x16xf32, #tpu.memory_space<any>>, %arg1: memref<2x16x16xf32, #tpu.memory_space<any>>) attributes {dimension_semantics = [], scalar_prefetch = 0 : i64, scratch_operands = 0 : i64, tpu.core_type = #tpu.core_type<tc>} {
    return
  }
}

</mosaic_0001>

<llo_original>
// kernel: _identity_forward_impl.1
$region0: #{_identity_forward_impl.1}
  #allocation0 [shape = 'u32[]', space=smem, size = 0x4, offset = 0x4, fixed_abs, tag = 'smem constant byte address 0x4 - core index']
  #allocation1 [shape = 'u32[144,128]{1,0:T(1,128)}', space=vmem, size = 0x12000, scoped, tag = 'internal scratch']
  %s0 = inlined_call_operand.hbm [shape: f32[2,16,16], index: 0, kind: input, shape index: {}, may-alias: {0,1}]
  %s1 = inlined_call_operand.hbm [shape: f32[2,16,16], index: 1, kind: output, shape index: {}, may-alias: {0,1}]
  %s2 = sld [smem:[#allocation0]]
  $region2: #{_identity_forward_impl.1} parent=0
    _
  %s4 = ssub.s32 1, %s2
  %s5 = scalar_select 0, %s4, %s2

</llo_original>
